<compile_context>
chip_gen: v7x
topology: tpu7x:2x2x1
jax: 0.10.0
libtpu: 0.0.40
codegen_flags: <defaults>
</compile_context>

<pallas_src>
import functools

import jax
import jax.numpy as jnp
from jax import lax
from jax.experimental import pallas as pl
from jax.experimental.pallas import tpu as pltpu

# ---------------------------------------------------------------------------
# Problem sizes (small, consistent with the module: batch_size = 3 -> top_k = 3)
# ---------------------------------------------------------------------------
NUM_QUERIES = 3      # number of (kw1, kw2) query pairs
NUM_CAND = 16        # candidates returned by the sparse retriever per query
HIDDEN = 32          # encoder embedding width
PROJ = 32            # dense projection width
TOP_K = 3            # == batch_size in the reference code
EPS = 1e-12          # torch.nn.functional.normalize default eps


# ---------------------------------------------------------------------------
# Pallas kernel: dense score function (single grid step, single fused matmul)
#   scores[q, n] = < normalize(W @ sent[q, n] + b), normalize(W @ query[q] + b) >
# ---------------------------------------------------------------------------
def _score_kernel(x_ref, w_ref, b_ref, out_ref, *, num_queries, num_cand, group):
    # x_ref  : (B*G, H) VMEM -- per query: N candidate rows, then the query row,
    #                           then zero padding up to G (G multiple of 8)
    # w_ref  : (H, P)   VMEM -- projection weight
    # b_ref  : (1, P)   VMEM -- projection bias
    # out_ref: (B, N)   VMEM -- cosine scores, written as one slab
    w = w_ref[...]
    b = b_ref[...]

    # One fused MXU matmul for every candidate row AND every query row.
    p = jnp.dot(x_ref[...], w, preferred_element_type=jnp.float32) + b      # (B*G, P)

    # L2 normalize (== torch normalize: x / max(||x||, eps)) via rsqrt on the EUP.
    inv = lax.rsqrt(jnp.maximum(jnp.sum(p * p, axis=-1, keepdims=True), EPS * EPS))
    nrm = (p * inv).reshape(num_queries, group, p.shape[-1])                 # (B, G, P)

    # Split the packed rows: candidates vs. the query row of each group.
    s_n = nrm[:, :num_cand, :]                                               # (B, N, P)
    q_n = nrm[:, num_cand:num_cand + 1, :]                                   # (B, 1, P)

    # Cosine similarity: elementwise multiply + lane reduce (no transpose, no MXU).
    out_ref[...] = jnp.sum(s_n * q_n, axis=-1)                               # (B, N)


def score_candidates(sent_emb, query_emb, w, b):
    """sent_emb: (B, N, H) f32, query_emb: (B, H) f32 -> cosine scores (B, N) f32."""
    B, N, H = sent_emb.shape
    P = w.shape[1]

    # Pack [candidates ; query ; zero padding] per query so groups are sublane-aligned.
    G = ((N + 1 + 7) // 8) * 8                                   # 24 for N = 16
    packed = jnp.concatenate([sent_emb, query_emb[:, None, :]], axis=1)       # (B, N+1, H)
    packed = jnp.pad(packed, ((0, 0), (0, G - (N + 1)), (0, 0)))              # (B, G, H)
    packed_flat = packed.reshape(B * G, H)                                    # free XLA reshape

    kernel = functools.partial(_score_kernel,
                               num_queries=B, num_cand=N, group=G)
    return pl.pallas_call(
        kernel,
        out_shape=jax.ShapeDtypeStruct((B, N), jnp.float32),
        grid_spec=pltpu.PrefetchScalarGridSpec(
            num_scalar_prefetch=0,
            grid=(1,),                    # single grid step: whole problem fits in VMEM
            in_specs=[
                pl.BlockSpec((B * G, H), lambda i: (0, 0)),
                pl.BlockSpec((H, P), lambda i: (0, 0)),
                pl.BlockSpec((1, P), lambda i: (0, 0)),
            ],
            out_specs=pl.BlockSpec((B, N), lambda i: (0, 0)),
        ),
    )(packed_flat, w, b)


# ---------------------------------------------------------------------------
# Forward pass (mirrors the retrieval-with-score loop around ScoreFunction1)
# ---------------------------------------------------------------------------
def dense_retriever_with_score_forward(cand_emb, query_emb, w, b, top_k=TOP_K):
    """
    cand_emb : (B, N, H) candidate sentence embeddings
               (stand-in for sparse retrieval + encoding of candidate_sents)
    query_emb: (B, H) query embeddings (stand-in for encoding "kw1 <RELATION> kw2")
    Returns (top_idx, scores):
      top_idx: (B, top_k) indices of the retained candidates
      scores : (B, top_k) their scores.  Re-running the score function on the
               retained candidates is mathematically identical to gathering the
               phase-1 scores, so the phase-2 re-score pass is replaced by top_k's
               gathered values.
    """
    all_scores = score_candidates(cand_emb, query_emb, w, b)     # (B, N)  phase 1
    top_scores, top_idx = jax.lax.top_k(all_scores, top_k)       # ntopidx + gather
    # TODO(synk): my_encode(retrieved_sents) runs a BertTokenizer over raw strings;
    # no Pallas equivalent -- the retrieved indices are returned instead.
    return top_idx, top_scores


# ---------------------------------------------------------------------------
# Driver
# ---------------------------------------------------------------------------
if __name__ == "__main__":
    key = jax.random.PRNGKey(0)
    k_cand, k_query, k_w, k_b = jax.random.split(key, 4)

    # TODO(synk): SparseRetrieveSentForPairCoOccur.retrieve works on strings;
    # candidates/queries are synthesized as embeddings here.
    cand_emb = jax.random.normal(k_cand, (NUM_QUERIES, NUM_CAND, HIDDEN),
                                 dtype=jnp.float32)
    query_emb = jax.random.normal(k_query, (NUM_QUERIES, HIDDEN),
                                  dtype=jnp.float32)
    w = jax.random.normal(k_w, (HIDDEN, PROJ), dtype=jnp.float32) * 0.05
    b = jax.random.normal(k_b, (1, PROJ), dtype=jnp.float32) * 0.01

    fwd = jax.jit(functools.partial(dense_retriever_with_score_forward,
                                    top_k=TOP_K))
    top_idx, scores = fwd(cand_emb, query_emb, w, b)
    jax.block_until_ready((top_idx, scores))

    # Pure-JAX reference of the score function (torch-style sqrt + divide).
    def ref_scores(sent, q):
        sp = sent @ w + b                                        # (B, N, P)
        qp = q @ w + b                                           # (B, P)
        sn = sp / jnp.maximum(jnp.linalg.norm(sp, axis=-1, keepdims=True), EPS)
        qn = qp / jnp.maximum(jnp.linalg.norm(qp, axis=-1, keepdims=True), EPS)
        return jnp.sum(sn * qn[:, None, :], axis=-1)             # (B, N)

    ref_all = ref_scores(cand_emb, query_emb)
    ref_top, ref_idx = jax.lax.top_k(ref_all, TOP_K)

    assert top_idx.shape == (NUM_QUERIES, TOP_K)
    assert scores.shape == (NUM_QUERIES, TOP_K)
    assert jnp.array_equal(top_idx, ref_idx), (top_idx, ref_idx)
    assert jnp.allclose(scores, ref_top, atol=1e-4), (scores, ref_top)

    print("KERNEL_OK")
</pallas_src>

<mosaic_0001>
module attributes {stable_mosaic.version = 11 : i64} {
  func.func @_score_kernel(%arg0: i32, %arg1: memref<72x32xf32, #tpu.memory_space<vmem>>, %arg2: memref<32x32xf32, #tpu.memory_space<vmem>>, %arg3: memref<1x32xf32, #tpu.memory_space<vmem>>, %arg4: memref<3x16xf32, #tpu.memory_space<vmem>>) attributes {dimension_semantics = [#tpu.dimension_semantics<arbitrary>], iteration_bounds = array<i64: 1>, scalar_prefetch = 0 : i64, scratch_operands = 0 : i64, tpu.core_type = #tpu.core_type<tc>, window_params = [{pipeline_mode = #tpu.pipeline_mode<synchronous>, transform_indices = @transform_0, window_bounds = array<i64: 72, 32>}, {pipeline_mode = #tpu.pipeline_mode<synchronous>, transform_indices = @transform_1, window_bounds = array<i64: 32, 32>}, {pipeline_mode = #tpu.pipeline_mode<synchronous>, transform_indices = @transform_2, window_bounds = array<i64: 1, 32>}, {pipeline_mode = #tpu.pipeline_mode<synchronous>, transform_indices = @transform_3, window_bounds = array<i64: 3, 16>}]} {
    %c0 = arith.constant 0 : index
    %c0_0 = arith.constant 0 : index
    %0 = vector.load %arg2[%c0, %c0_0] : memref<32x32xf32, #tpu.memory_space<vmem>>, vector<32x32xf32>
    %c0_1 = arith.constant 0 : index
    %c0_2 = arith.constant 0 : index
    %1 = vector.load %arg3[%c0_1, %c0_2] : memref<1x32xf32, #tpu.memory_space<vmem>>, vector<1x32xf32>
    %c0_3 = arith.constant 0 : index
    %c0_4 = arith.constant 0 : index
    %2 = vector.load %arg1[%c0_3, %c0_4] : memref<72x32xf32, #tpu.memory_space<vmem>>, vector<72x32xf32>
    %cst = arith.constant dense<0.000000e+00> : vector<72x32xf32>
    %3 = tpu.matmul %2, %0, %cst {dimension_numbers = #tpu.dot_dimension_numbers<[1], [0], [0], [1], [0, 0, 1, 1], [], []>} : vector<72x32xf32>, vector<32x32xf32>, vector<72x32xf32> -> vector<72x32xf32>
    %4 = vector.broadcast %1 : vector<1x32xf32> to vector<72x32xf32>
    %5 = arith.addf %3, %4 : vector<72x32xf32>
    %6 = arith.mulf %5, %5 : vector<72x32xf32>
    %cst_5 = arith.constant dense<0.000000e+00> : vector<72xf32>
    %7 = vector.multi_reduction <add>, %6, %cst_5 [1] : vector<72x32xf32> to vector<72xf32>
    %8 = vector.shape_cast %7 : vector<72xf32> to vector<72x1xf32>
    %cst_6 = arith.constant 1.000000e-24 : f32
    %9 = vector.broadcast %cst_6 : f32 to vector<72x1xf32>
    %10 = arith.maximumf %8, %9 : vector<72x1xf32>
    %11 = math.rsqrt %10 : vector<72x1xf32>
    %12 = vector.broadcast %11 : vector<72x1xf32> to vector<72x32xf32>
    %13 = arith.mulf %5, %12 : vector<72x32xf32>
    %14 = vector.shape_cast %13 : vector<72x32xf32> to vector<3x24x32xf32>
    %15 = vector.extract_strided_slice %14 {offsets = [0, 0, 0], sizes = [3, 16, 32], strides = [1, 1, 1]} : vector<3x24x32xf32> to vector<3x16x32xf32>
    %16 = vector.extract_strided_slice %14 {offsets = [0, 16, 0], sizes = [3, 1, 32], strides = [1, 1, 1]} : vector<3x24x32xf32> to vector<3x1x32xf32>
    %17 = vector.broadcast %16 : vector<3x1x32xf32> to vector<3x16x32xf32>
    %18 = arith.mulf %15, %17 : vector<3x16x32xf32>
    %cst_7 = arith.constant dense<0.000000e+00> : vector<3x16xf32>
    %19 = vector.multi_reduction <add>, %18, %cst_7 [2] : vector<3x16x32xf32> to vector<3x16xf32>
    %c0_8 = arith.constant 0 : index
    %c0_9 = arith.constant 0 : index
    %20 = vector.load %arg4[%c0_8, %c0_9] : memref<3x16xf32, #tpu.memory_space<vmem>>, vector<3x16xf32>
    tpu.vector_store %arg4[%c0_8, %c0_9], %19 {strides = array<i32>} : memref<3x16xf32, #tpu.memory_space<vmem>>, vector<3x16xf32>,
    return
  }
  func.func @transform_0(%arg0: i32) -> (i32, i32) {
    %c0_i32 = arith.constant 0 : i32
    %c0_i32_0 = arith.constant 0 : i32
    %c0_i32_1 = arith.constant 0 : i32
    return %c0_i32, %c0_i32_0 : i32, i32
  }
  func.func @transform_1(%arg0: i32) -> (i32, i32) {
    %c0_i32 = arith.constant 0 : i32
    %c0_i32_0 = arith.constant 0 : i32
    %c0_i32_1 = arith.constant 0 : i32
    return %c0_i32, %c0_i32_0 : i32, i32
  }
  func.func @transform_2(%arg0: i32) -> (i32, i32) {
    %c0_i32 = arith.constant 0 : i32
    %c0_i32_0 = arith.constant 0 : i32
    %c0_i32_1 = arith.constant 0 : i32
    return %c0_i32, %c0_i32_0 : i32, i32
  }
  func.func @transform_3(%arg0: i32) -> (i32, i32) {
    %c0_i32 = arith.constant 0 : i32
    %c0_i32_0 = arith.constant 0 : i32
    %c0_i32_1 = arith.constant 0 : i32
    return %c0_i32, %c0_i32_0 : i32, i32
  }
}

</mosaic_0001>

<llo_original>
// kernel: dense_retriever_with_score_forward.1
$region0: #{dense_retriever_with_score_forward.1}
  #allocation0 [shape = 'u32[]', space=smem, size = 0x4, offset = 0x4, fixed_abs, tag = 'smem constant byte address 0x4 - core index']
  #allocation1 [shape = 'u32[144,128]{1,0:T(1,128)}', space=vmem, size = 0x12000, scoped, tag = 'internal scratch']
  %s0 = inlined_call_operand.vmem [shape: f32[72,32], index: 0, kind: input, shape index: {}]
  %s1 = inlined_call_operand.vmem [shape: f32[32,32], index: 1, kind: input, shape index: {}]
  %s2 = inlined_call_operand.vmem [shape: f32[1,32], index: 2, kind: input, shape index: {}]
  %s3 = inlined_call_operand.vmem [shape: f32[3,16], index: 3, kind: output, shape index: {}]
  %s4 = sld [smem:[#allocation0]]
  $region22: #{dense_retriever_with_score_forward.1} parent=0
    _
  %s6 = ssub.s32 1, %s4
  %s7 = scalar_select 0, %s6, %s4
  // Predicated region
  $region2: #{dense_retriever_with_score_forward.1} parent=0 // pred_check
    _
  $region3: #{dense_retriever_with_score_forward.1} parent=0 // pred_check_branch
    %9 = sbr.rel (0) target = $region5
  $region4: #{dense_retriever_with_score_forward.1} parent=0 // pred_region
    _
  $region5: #{dense_retriever_with_score_forward.1} parent=0 // pred_fallthru
    _
  // Predicated region
  $region6: #{dense_retriever_with_score_forward.1} parent=0 // pred_check
    _
  $region7: #{dense_retriever_with_score_forward.1} parent=0 // pred_check_branch
    %11 = sbr.rel (0) target = $region9
  $region8: #{dense_retriever_with_score_forward.1} parent=0 // pred_region
    _
  $region9: #{dense_retriever_with_score_forward.1} parent=0 // pred_fallthru
    _
  // Predicated region
  $region10: #{dense_retriever_with_score_forward.1} parent=0 // pred_check
    _
  $region11: #{dense_retriever_with_score_forward.1} parent=0 // pred_check_branch
    %13 = sbr.rel (0) target = $region13
  $region12: #{dense_retriever_with_score_forward.1} parent=0 // pred_region
    _
  $region13: #{dense_retriever_with_score_forward.1} parent=0 // pred_fallthru
    _
  %v14 = vld [vmem:[%s1] sm:$0xff]
  %v15 = vld [vmem:[%s1 + $0x8] sm:$0xff]
  %v16 = vld [vmem:[%s1 + $0x10] sm:$0xff]
  %v17 = vld [vmem:[%s1 + $0x18] sm:$0xff]
  %v18 = vld [vmem:[%s2] sm:$0x1]
  %v19 = vld [vmem:[%s0] sm:$0xff]
  %v20 = vld [vmem:[%s0 + $0x8] sm:$0xff]
  %v21 = vld [vmem:[%s0 + $0x10] sm:$0xff]
  %v22 = vld [vmem:[%s0 + $0x18] sm:$0xff]
  %v23 = vld [vmem:[%s0 + $0x20] sm:$0xff]
  %v24 = vld [vmem:[%s0 + $0x28] sm:$0xff]
  %v25 = vld [vmem:[%s0 + $0x30] sm:$0xff]
  %v26 = vld [vmem:[%s0 + $0x38] sm:$0xff]
  %v27 = vld [vmem:[%s0 + $0x40] sm:$0xff]
  %v29 = vlaneseq
  %v30 = vshrl.u32 %v29, 7
  %v31 = vsub.s32 0, %v30
  %v32 = vrot.slane %v18, %v31
  %vm34 = vcmask 261120
  %v36 = vsel %vm34, %v19, 0
  %v39 = vsel %vm34, %v20, 0
  %v42 = vsel %vm34, %v21, 0
  %v45 = vsel %vm34, %v22, 0
  %v48 = vsel %vm34, %v23, 0
  %v51 = vsel %vm34, %v24, 0
  %v54 = vsel %vm34, %v25, 0
  %v57 = vsel %vm34, %v26, 0
  %v60 = vsel %vm34, %v27, 0
  %62 = vmatprep.subr.mxu0 0.0
  %63 = vmatpush1.msra.mxu0 %v14
  %64 = vmatprep.subr.mxu0 0.0
  %65 = vmatpush1.msra.mxu0 %v15
  %66 = vmatprep.subr.mxu0 0.0
  %67 = vmatpush1.msra.mxu0 %v16
  %68 = vmatprep.subr.mxu0 0.0
  %69 = vmatpush1.msra.mxu0 %v17
  %70 = vmatprep.subr.mxu0 0.0
  %71 = vmatpush1.msra.mxu0 0.0
  %72 = vmatprep.subr.mxu0 0.0
  %73 = vmatpush1.msra.mxu0 0.0
  %74 = vmatprep.subr.mxu0 0.0
  %75 = vmatpush1.msra.mxu0 0.0
  %76 = vmatprep.subr.mxu0 0.0
  %77 = vmatpush1.msra.mxu0 0.0
  %78 = vmatprep.subr.mxu0 0.0
  %79 = vmatpush1.msra.mxu0 0.0
  %80 = vmatprep.subr.mxu0 0.0
  %81 = vmatpush1.msra.mxu0 0.0
  %82 = vmatprep.subr.mxu0 0.0
  %83 = vmatpush1.msra.mxu0 0.0
  %84 = vmatprep.subr.mxu0 0.0
  %85 = vmatpush1.msra.mxu0 0.0
  %86 = vmatprep.subr.mxu0 0.0
  %87 = vmatpush1.msra.mxu0 0.0
  %88 = vmatprep.subr.mxu0 0.0
  %89 = vmatpush1.msra.mxu0 0.0
  %90 = vmatprep.subr.mxu0 0.0
  %91 = vmatpush1.msra.mxu0 0.0
  %92 = vmatprep.subr.mxu0 0.0
  %93 = vmatpush1.msra.mxu0 0.0
  %94 = vmatprep.subr.mxu0 0.0
  %95 = vmatpush1.msra.mxu0 0.0
  %96 = vmatprep.subr.mxu0 0.0
  %97 = vmatpush1.msra.mxu0 0.0
  %98 = vmatprep.subr.mxu0 0.0
  %99 = vmatpush1.msra.mxu0 0.0
  %100 = vmatprep.subr.mxu0 0.0
  %101 = vmatpush1.msra.mxu0 0.0
  %102 = vmatprep.subr.mxu0 0.0
  %103 = vmatpush1.msra.mxu0 0.0
  %104 = vmatprep.subr.mxu0 0.0
  %105 = vmatpush1.msra.mxu0 0.0
  %106 = vmatprep.subr.mxu0 0.0
  %107 = vmatpush1.msra.mxu0 0.0
  %108 = vmatprep.subr.mxu0 0.0
  %109 = vmatpush1.msra.mxu0 0.0
  %110 = vmatprep.subr.mxu0 0.0
  %111 = vmatpush1.msra.mxu0 0.0
  %112 = vmatprep.subr.mxu0 0.0
  %113 = vmatpush1.msra.mxu0 0.0
  %114 = vmatprep.subr.mxu0 0.0
  %115 = vmatpush1.msra.mxu0 0.0
  %116 = vmatprep.subr.mxu0 0.0
  %117 = vmatpush1.msra.mxu0 0.0
  %118 = vmatprep.subr.mxu0 0.0
  %119 = vmatpush1.msra.mxu0 0.0
  %120 = vmatprep.subr.mxu0 0.0
  %121 = vmatpush1.msra.mxu0 0.0
  %122 = vmatprep.subr.mxu0 0.0
  %123 = vmatpush1.msra.mxu0 0.0
  %124 = vmatprep.subr.mxu0 0.0
  %125 = vmatpush1.msra.mxu0 0.0
  %126 = vmatprep.mubr.f32.mxu0 0.0
  %127 = vmatmul.mubr.f32.gmra.mrb[0].mxu0 %v36
  %v128 = vpop.f32.mrb[0].mxu0
  %v129 = vadd.f32 %v32, %v128
  %v130 = vpop.f32.mrb[0].mxu0
  %131 = vmatprep.mubr.f32.mxu0 0.0
  %132 = vmatmul.mubr.f32.gmra.mrb[0].mxu0 %v39
  %v133 = vpop.f32.mrb[0].mxu0
  %v134 = vadd.f32 %v32, %v133
  %v135 = vpop.f32.mrb[0].mxu0
  %136 = vmatprep.mubr.f32.mxu0 0.0
  %137 = vmatmul.mubr.f32.gmra.mrb[0].mxu0 %v42
  %v138 = vpop.f32.mrb[0].mxu0
  %v139 = vadd.f32 %v32, %v138
  %v140 = vpop.f32.mrb[0].mxu0
  %141 = vmatprep.mubr.f32.mxu0 0.0
  %142 = vmatmul.mubr.f32.gmra.mrb[0].mxu0 %v45
  %v143 = vpop.f32.mrb[0].mxu0
  %v144 = vadd.f32 %v32, %v143
  %v145 = vpop.f32.mrb[0].mxu0
  %146 = vmatprep.mubr.f32.mxu0 0.0
  %147 = vmatmul.mubr.f32.gmra.mrb[0].mxu0 %v48
  %v148 = vpop.f32.mrb[0].mxu0
  %v149 = vadd.f32 %v32, %v148
  %v150 = vpop.f32.mrb[0].mxu0
  %151 = vmatprep.mubr.f32.mxu0 0.0
  %152 = vmatmul.mubr.f32.gmra.mrb[0].mxu0 %v51
  %v153 = vpop.f32.mrb[0].mxu0
  %v154 = vadd.f32 %v32, %v153
  %v155 = vpop.f32.mrb[0].mxu0
  %156 = vmatprep.mubr.f32.mxu0 0.0
  %157 = vmatmul.mubr.f32.gmra.mrb[0].mxu0 %v54
  %v158 = vpop.f32.mrb[0].mxu0
  %v159 = vadd.f32 %v32, %v158
  %v160 = vpop.f32.mrb[0].mxu0
  %161 = vmatprep.mubr.f32.mxu0 0.0
  %162 = vmatmul.mubr.f32.gmra.mrb[0].mxu0 %v57
  %v163 = vpop.f32.mrb[0].mxu0
  %v164 = vadd.f32 %v32, %v163
  %v165 = vpop.f32.mrb[0].mxu0
  %166 = vmatprep.mubr.f32.mxu0 0.0
  %167 = vmatmul.mubr.f32.gmra.mrb[0].mxu0 %v60
  %v168 = vpop.f32.mrb[0].mxu0
  %v169 = vadd.f32 %v32, %v168
  %v170 = vpop.f32.mrb[0].mxu0
  %171 = vdwg.mxu0
  %v172 = vmul.f32 %v129, %v129
  %v173 = vmul.f32 %v134, %v134
  %v174 = vmul.f32 %v139, %v139
  %v175 = vmul.f32 %v144, %v144
  %v176 = vmul.f32 %v149, %v149
  %v177 = vmul.f32 %v154, %v154
  %v178 = vmul.f32 %v159, %v159
  %v179 = vmul.f32 %v164, %v164
  %v180 = vmul.f32 %v169, %v169
  %v181 = vsel %vm34, %v172, 0.0
  %182 = vadd.xlane.f32.xlu0 %v181
  %v183 = vpop.xlane.xlu0 %182
  %v184 = vsel %vm34, %v173, 0.0
  %185 = vadd.xlane.f32.xlu0 %v184
  %v186 = vpop.xlane.xlu0 %185
  %v187 = vsel %vm34, %v174, 0.0
  %188 = vadd.xlane.f32.xlu0 %v187
  %v189 = vpop.xlane.xlu0 %188
  %v190 = vsel %vm34, %v175, 0.0
  %191 = vadd.xlane.f32.xlu0 %v190
  %v192 = vpop.xlane.xlu0 %191
  %v193 = vsel %vm34, %v176, 0.0
  %194 = vadd.xlane.f32.xlu0 %v193
  %v195 = vpop.xlane.xlu0 %194
  %v196 = vsel %vm34, %v177, 0.0
  %197 = vadd.xlane.f32.xlu0 %v196
  %v198 = vpop.xlane.xlu0 %197
  %v199 = vsel %vm34, %v178, 0.0
  %200 = vadd.xlane.f32.xlu0 %v199
  %v201 = vpop.xlane.xlu0 %200
  %v202 = vsel %vm34, %v179, 0.0
  %203 = vadd.xlane.f32.xlu0 %v202
  %v204 = vpop.xlane.xlu0 %203
  %v205 = vsel %vm34, %v180, 0.0
  %206 = vadd.xlane.f32.xlu0 %v205
  %v207 = vpop.xlane.xlu0 %206
  %v208 = vmax.f32 %v183, 1e-24
  %v209 = vmax.f32 %v186, 1e-24
  %v210 = vmax.f32 %v189, 1e-24
  %v211 = vmax.f32 %v192, 1e-24
  %v212 = vmax.f32 %v195, 1e-24
  %v213 = vmax.f32 %v198, 1e-24
  %v214 = vmax.f32 %v201, 1e-24
  %v215 = vmax.f32 %v204, 1e-24
  %v216 = vmax.f32 %v207, 1e-24
  %v217 = vrsqrt.pop %v208
  %v218 = vrsqrt.pop %v209
  %v219 = vrsqrt.pop %v210
  %v220 = vrsqrt.pop %v211
  %v221 = vrsqrt.pop %v212
  %v222 = vrsqrt.pop %v213
  %v223 = vrsqrt.pop %v214
  %v224 = vrsqrt.pop %v215
  %v225 = vrsqrt.pop %v216
  %v226 = vmul.f32 %v129, %v217
  %v227 = vmul.f32 %v134, %v218
  %v228 = vmul.f32 %v139, %v219
  %v229 = vmul.f32 %v144, %v220
  %v230 = vmul.f32 %v149, %v221
  %v231 = vmul.f32 %v154, %v222
  %v232 = vmul.f32 %v159, %v223
  %v233 = vmul.f32 %v164, %v224
  %v234 = vmul.f32 %v169, %v225
  %v235 = vlaneseq
  %v236 = vshrl.u32 %v235, 7
  %v237 = vsub.s32 0, %v236
  %v238 = vrot.slane %v228, %v237
  %v239 = vlaneseq
  %v240 = vshrl.u32 %v239, 7
  %v241 = vsub.s32 0, %v240
  %v242 = vrot.slane %v231, %v241
  %v243 = vlaneseq
  %v244 = vshrl.u32 %v243, 7
  %v245 = vsub.s32 0, %v244
  %v246 = vrot.slane %v234, %v245
  %v247 = vmul.f32 %v226, %v238
  %v248 = vmul.f32 %v227, %v238
  %v249 = vmul.f32 %v229, %v242
  %v250 = vmul.f32 %v230, %v242
  %v251 = vmul.f32 %v232, %v246
  %v252 = vmul.f32 %v233, %v246
  %v253 = vsel %vm34, %v247, 0.0
  %254 = vadd.xlane.f32.xlu0 %v253
  %v255 = vpop.xlane.xlu0 %254
  %v256 = vsel %vm34, %v248, 0.0
  %257 = vadd.xlane.f32.xlu0 %v256
  %v258 = vpop.xlane.xlu0 %257
  %v259 = vsel %vm34, %v249, 0.0
  %260 = vadd.xlane.f32.xlu0 %v259
  %v261 = vpop.xlane.xlu0 %260
  %v262 = vsel %vm34, %v250, 0.0
  %263 = vadd.xlane.f32.xlu0 %v262
  %v264 = vpop.xlane.xlu0 %263
  %v265 = vsel %vm34, %v251, 0.0
  %266 = vadd.xlane.f32.xlu0 %v265
  %v267 = vpop.xlane.xlu0 %266
  %v268 = vsel %vm34, %v252, 0.0
  %269 = vadd.xlane.f32.xlu0 %v268
  %v270 = vpop.xlane.xlu0 %269
  %v277 = vlaneseq
  %v278 = vand.u32 %v277, 127
  %v279 = vlaneseq
  %v280 = vshrl.u32 %v279, 7
  %v281 = vsub.s32 %v278, %v280
  %v282 = vrot.slane %v255, %v281
  %v283 = vadd.s32 %v278, 4294967288
  %v284 = vlaneseq
  %v285 = vshrl.u32 %v284, 7
  %v286 = vsub.s32 %v283, %v285
  %v287 = vrot.slane %v258, %v286
  %vm288 = vcmask 130112
  %v289 = vsel %vm288, %v287, %v282
  %v290 = vlaneseq
  %v291 = vshrl.u32 %v290, 7
  %v292 = vsub.s32 %v278, %v291
  %v293 = vrot.slane %v261, %v292
  %v294 = vlaneseq
  %v295 = vshrl.u32 %v294, 7
  %v296 = vsub.s32 %v283, %v295
  %v297 = vrot.slane %v264, %v296
  %v298 = vsel %vm288, %v297, %v293
  %v299 = vlaneseq
  %v300 = vshrl.u32 %v299, 7
  %v301 = vsub.s32 %v278, %v300
  %v302 = vrot.slane %v267, %v301
  %v303 = vlaneseq
  %v304 = vshrl.u32 %v303, 7
  %v305 = vsub.s32 %v283, %v304
  %v306 = vrot.slane %v270, %v305
  %v307 = vsel %vm288, %v306, %v302
  %vm308 = vcmask 1041409
  %v309 = vsel %vm308, %v298, %v289
  %vm310 = vcmask 1042434
  %v311 = vsel %vm310, %v307, %v309
  %vm313 = vcmask 124928
  %314 = vst.msk [vmem:[%s3] sm:$0x7] %vm313, %v311
  // Predicated region
  $region14: #{dense_retriever_with_score_forward.1} parent=0 // pred_check
    _
  $region15: #{dense_retriever_with_score_forward.1} parent=0 // pred_check_branch
    %316 = sbr.rel (0) target = $region17
  $region16: #{dense_retriever_with_score_forward.1} parent=0 // pred_region
    _
  $region17: #{dense_retriever_with_score_forward.1} parent=0 // pred_fallthru
    _
  // Predicated region
  $region18: #{dense_retriever_with_score_forward.1} parent=0 // pred_check
    _
  $region19: #{dense_retriever_with_score_forward.1} parent=0 // pred_check_branch
    %318 = sbr.rel (0) target = $region21
  $region20: #{dense_retriever_with_score_forward.1} parent=0 // pred_region
    _
  $region21: #{dense_retriever_with_score_forward.1} parent=0 // pred_fallthru
    _

</llo_original>
